<compile_context>
chip_gen: v7x
topology: tpu7x:2x2x1
jax: 0.10.0
libtpu: 0.0.40
codegen_flags: <defaults>
</compile_context>

<pallas_src>
import jax
import jax.numpy as jnp
from jax.experimental import pallas as pl
from jax.experimental.pallas import tpu as pltpu


# Channel mixes with c_in * c_out <= this run as unrolled VPU MACs; larger
# channel counts use the MXU matmul path (retuned down from 256 per review).
_VPU_CHANNEL_LIMIT = 64

# Cap on unrolled scalar*slab MACs per grid step (keeps trace size / icache
# footprint sane when many batch images are blocked together).
_UNROLL_MAC_LIMIT = 256


def _cdiv(a, b):
    return -(-a // b)


def _round_up(x, m):
    return _cdiv(x, m) * m


def _largest_divisor(x, cap, mult=1):
    """Largest divisor of `x` that is a multiple of `mult` and <= `cap`.

    Falls back to `mult` (callers guarantee `mult` divides `x`).
    """
    d = (min(cap, x) // mult) * mult
    while d > mult:
        if x % d == 0:
            return d
        d -= mult
    return mult


def _vmem_budget():
    """Generation-aware VMEM budget.

    v5e/v6e have 128 MiB of physical VMEM per core, v7x only 64 MiB.  Request
    at most half of physical for this kernel (capped at 100 MiB); most of that
    goes to the double-buffered in/out tiles, with ~4 MiB headroom.
    """
    vmem_phys = 64 << 20  # conservative default == v7x
    try:
        vmem_phys = int(pltpu.get_tpu_info().vmem_capacity_bytes)
    except Exception:
        pass
    vmem_limit = min(max(vmem_phys // 2, 16 << 20), 100 << 20)
    tile_budget = max(vmem_limit - (4 << 20), 2 << 20)
    return vmem_limit, tile_budget


# ----------------------------------------------------------------------------
# Kernels
# ----------------------------------------------------------------------------

def _conv1x1_vpu_kernel(x_ref, w_ref, b_ref, o_ref):
    """Small-channel path: unrolled scalar * (S,128)-slab MACs on the VPU.

    x_ref: (bn, c_in,  S, 128) VMEM  (sublane/lane-dense per-channel slabs)
    w_ref: (c_out, c_in)       SMEM  (scalars)
    b_ref: (c_out,)            SMEM  (scalars)
    o_ref: (bn, c_out, S, 128) VMEM
    """
    bn, c_in, _, _ = x_ref.shape
    c_out = o_ref.shape[1]
    for b in range(bn):
        # Each per-channel slab is a dense (S, 128) tile -> full 8x128 vregs.
        xs = [x_ref[b, ci, :, :].astype(jnp.float32) for ci in range(c_in)]
        for co in range(c_out):
            acc = w_ref[co, 0] * xs[0] + b_ref[co]
            for ci in range(1, c_in):
                acc = acc + w_ref[co, ci] * xs[ci]
            # Direct slab store: no concatenate, no extra VMEM copy.
            o_ref[b, co, :, :] = acc.astype(o_ref.dtype)


def _conv1x1_mxu_kernel(x_ref, w_ref, b_ref, o_ref):
    """Large-channel path: (c_out, c_in) @ (c_in, T) on the MXU.

    x_ref: (c_in, T) VMEM, w_ref: (c_out, c_in) VMEM, b_ref: (c_out, 1) VMEM.
    Operands are cast to bf16 (f32 accumulate) to hit the MXU's native bf16
    path; this is the usual inference precision trade-off for a 1x1 conv.
    """
    x16 = x_ref[...].astype(jnp.bfloat16)
    w16 = w_ref[...].astype(jnp.bfloat16)
    acc = jnp.dot(w16, x16, preferred_element_type=jnp.float32)
    o_ref[...] = (acc + b_ref[...]).astype(o_ref.dtype)


# ----------------------------------------------------------------------------
# Wrappers
# ----------------------------------------------------------------------------

def _plan_vpu_tiles(n, c_in, c_out, hw, itemsize):
    vmem_limit, tile_budget = _vmem_budget()
    # Bytes of one double-buffered in+out unit (bn=1, one 128-lane sublane-row).
    per_unit = 2 * (c_in + c_out) * 128 * itemsize
    max_units = max(1, tile_budget // per_unit)

    s_total = _cdiv(hw, 128)
    if s_total <= max_units:
        s_tile = s_total                       # full spatial extent per image
    else:
        # Must split: block sublane extent has to be a multiple of 8.
        s_total = _round_up(s_total, 8)
        s_tile = _largest_divisor(s_total, max_units, mult=8)

    # Block several batch images per grid step for small images (amortizes the
    # ~0.35us per-grid-step overhead), bounded by VMEM and the unroll cap.
    bn_cap = max(1, min(max_units // max(1, s_tile),
                        _UNROLL_MAC_LIMIT // max(1, c_in * c_out)))
    bn = _largest_divisor(n, bn_cap, mult=1)

    # v7x has 2 TensorCores: keep >= 2 steps on a 'parallel' grid axis.
    if (n // bn) * (s_total // s_tile) < 2:
        if n >= 2:
            bn = _largest_divisor(n, n // 2, mult=1)
        elif s_tile == s_total and s_total % 16 == 0:
            s_tile = s_total // 2
    return bn, s_tile, s_total, vmem_limit


def _forward_vpu(x_nchw, weight, bias):
    n, c_in, h, w = x_nchw.shape
    c_out = weight.shape[0]
    hw = h * w
    itemsize = x_nchw.dtype.itemsize

    bn, s_tile, s_total, vmem_limit = _plan_vpu_tiles(n, c_in, c_out, hw, itemsize)
    hw_pad = s_total * 128

    x = x_nchw.reshape(n, c_in, hw)
    if hw_pad != hw:
        # Pad spatial to a lane-dense multiple of 128 (cheap, contiguous) so
        # every store is an unmasked vst.
        x = jnp.pad(x, ((0, 0), (0, 0), (0, hw_pad - hw)))
    x = x.reshape(n, c_in, s_total, 128)

    grid = (n // bn, s_total // s_tile)

    cost = pl.CostEstimate(
        flops=2 * n * hw_pad * c_in * c_out,
        transcendentals=0,
        bytes_accessed=(n * hw_pad * (c_in + c_out) + c_out * c_in + c_out) * itemsize,
    )

    out = pl.pallas_call(
        _conv1x1_vpu_kernel,
        out_shape=jax.ShapeDtypeStruct((n, c_out, s_total, 128), x_nchw.dtype),
        grid_spec=pltpu.PrefetchScalarGridSpec(
            num_scalar_prefetch=0,
            grid=grid,
            in_specs=[
                pl.BlockSpec((bn, c_in, s_tile, 128), lambda i, j: (i, 0, j, 0)),
                pl.BlockSpec(memory_space=pltpu.MemorySpace.SMEM),   # weight
                pl.BlockSpec(memory_space=pltpu.MemorySpace.SMEM),   # bias
            ],
            out_specs=pl.BlockSpec((bn, c_out, s_tile, 128),
                                   lambda i, j: (i, 0, j, 0)),
        ),
        compiler_params=pltpu.CompilerParams(
            dimension_semantics=("parallel", "parallel"),
            vmem_limit_bytes=int(vmem_limit),
        ),
        cost_estimate=cost,
    )(x, weight, bias)

    out = out.reshape(n, c_out, hw_pad)
    if hw_pad != hw:
        out = out[:, :, :hw]
    return out.reshape(n, c_out, h, w)


def _forward_mxu(x_nchw, weight, bias):
    n, c_in, h, w = x_nchw.shape
    c_out = weight.shape[0]
    hw = h * w
    itemsize = x_nchw.dtype.itemsize

    vmem_limit, tile_budget = _vmem_budget()
    per_unit = 2 * (c_in + c_out) * 128 * itemsize
    max_units = max(1, tile_budget // per_unit)

    s_total = _cdiv(hw, 128)
    if s_total <= max_units:
        t_units = s_total
    else:
        t_units = _largest_divisor(s_total, max_units, mult=1)
    # v7x megacore: keep >= 2 grid steps when a single tile covers everything.
    if n * (s_total // t_units) < 2 and t_units % 2 == 0:
        t_units //= 2
    hw_pad = s_total * 128
    t_tile = t_units * 128

    x = x_nchw.reshape(n, c_in, hw)
    if hw_pad != hw:
        x = jnp.pad(x, ((0, 0), (0, 0), (0, hw_pad - hw)))

    grid = (n, hw_pad // t_tile)

    cost = pl.CostEstimate(
        flops=2 * n * hw_pad * c_in * c_out,
        transcendentals=0,
        bytes_accessed=(n * hw_pad * (c_in + c_out) + c_out * c_in + c_out) * itemsize,
    )

    out = pl.pallas_call(
        _conv1x1_mxu_kernel,
        out_shape=jax.ShapeDtypeStruct((n, c_out, hw_pad), x_nchw.dtype),
        grid_spec=pltpu.PrefetchScalarGridSpec(
            num_scalar_prefetch=0,
            grid=grid,
            in_specs=[
                pl.BlockSpec((None, c_in, t_tile), lambda i, j: (i, 0, j)),
                pl.BlockSpec((c_out, c_in), lambda i, j: (0, 0)),
                pl.BlockSpec((c_out, 1), lambda i, j: (0, 0)),
            ],
            out_specs=pl.BlockSpec((None, c_out, t_tile), lambda i, j: (i, 0, j)),
        ),
        compiler_params=pltpu.CompilerParams(
            dimension_semantics=("parallel", "parallel"),
            vmem_limit_bytes=int(vmem_limit),
        ),
        cost_estimate=cost,
    )(x, weight, bias.reshape(c_out, 1))

    if hw_pad != hw:
        out = out[:, :, :hw]
    return out.reshape(n, c_out, h, w)


@jax.jit
def conv_block_forward(x_nchw, weight, bias):
    """ConvBlock forward: 1x1 Conv2d, stride 1, padding 0, NCHW in/out.

    x_nchw: (N, C_in, H, W) float32
    weight: (C_out, C_in)   float32  (squeezed from (C_out, C_in, 1, 1))
    bias:   (C_out,)        float32
    returns (N, C_out, H, W)
    """
    c_in = x_nchw.shape[1]
    c_out = weight.shape[0]
    if c_in * c_out <= _VPU_CHANNEL_LIMIT:
        return _forward_vpu(x_nchw, weight, bias)
    return _forward_mxu(x_nchw, weight, bias)


def init_conv_block_params(key, in_channels, out_channels):
    """Match PyTorch _init_weights: xavier_uniform_ on conv weight, zero bias."""
    fan_in = in_channels       # kernel_size = 1x1
    fan_out = out_channels
    bound = jnp.sqrt(6.0 / (fan_in + fan_out))
    weight = jax.random.uniform(
        key, (out_channels, in_channels), jnp.float32, minval=-bound, maxval=bound)
    bias = jnp.zeros((out_channels,), jnp.float32)
    return weight, bias


if __name__ == "__main__":
    key = jax.random.PRNGKey(0)
    k_x, k_w = jax.random.split(key)

    # ConvBlock(in_channels=4) with hidden_channels=None, out_channels=None
    # => out_channels == in_channels == 4.
    N, C_IN, H, W = 2, 4, 16, 16
    C_OUT = C_IN

    x = jax.random.normal(k_x, (N, C_IN, H, W), jnp.float32)
    weight, bias = init_conv_block_params(k_w, C_IN, C_OUT)

    out = conv_block_forward(x, weight, bias)
    out = jax.block_until_ready(out)

    # Pure-JAX reference: 1x1 conv == einsum over the channel axis + bias.
    ref = jnp.einsum("nchw,oc->nohw", x, weight) + bias[None, :, None, None]
    assert out.shape == (N, C_OUT, H, W)
    assert jnp.allclose(out, ref, atol=1e-5, rtol=1e-5)

    print("KERNEL_OK")
</pallas_src>

<mosaic_0001>
module attributes {stable_mosaic.version = 11 : i64} {
  func.func @_conv1x1_vpu_kernel(%arg0: i32, %arg1: i32, %arg2: memref<1x4x2x128xf32, #tpu.memory_space<vmem>>, %arg3: memref<4x4xf32, #tpu.memory_space<smem>>, %arg4: memref<4xf32, #tpu.memory_space<smem>>, %arg5: memref<1x4x2x128xf32, #tpu.memory_space<vmem>>) attributes {dimension_semantics = [#tpu.dimension_semantics<parallel>, #tpu.dimension_semantics<parallel>], iteration_bounds = array<i64: 2, 1>, scalar_prefetch = 0 : i64, scratch_operands = 0 : i64, tpu.core_type = #tpu.core_type<tc>, window_params = [{transform_indices = @transform_0, window_bounds = array<i64: 1, 4, 2, 128>}, {transform_indices = @transform_1, window_bounds = array<i64: 4, 4>}, {transform_indices = @transform_2, window_bounds = array<i64: 4>}, {transform_indices = @transform_3, window_bounds = array<i64: 1, 4, 2, 128>}]} {
    %c0 = arith.constant 0 : index
    %c0_0 = arith.constant 0 : index
    %c0_1 = arith.constant 0 : index
    %c0_2 = arith.constant 0 : index
    %0 = vector.load %arg2[%c0, %c0_0, %c0_1, %c0_2] : memref<1x4x2x128xf32, #tpu.memory_space<vmem>>, vector<1x1x2x128xf32>
    %1 = vector.shape_cast %0 : vector<1x1x2x128xf32> to vector<2x128xf32>
    %c0_3 = arith.constant 0 : index
    %c1 = arith.constant 1 : index
    %c0_4 = arith.constant 0 : index
    %c0_5 = arith.constant 0 : index
    %2 = vector.load %arg2[%c0_3, %c1, %c0_4, %c0_5] : memref<1x4x2x128xf32, #tpu.memory_space<vmem>>, vector<1x1x2x128xf32>
    %3 = vector.shape_cast %2 : vector<1x1x2x128xf32> to vector<2x128xf32>
    %c0_6 = arith.constant 0 : index
    %c2 = arith.constant 2 : index
    %c0_7 = arith.constant 0 : index
    %c0_8 = arith.constant 0 : index
    %4 = vector.load %arg2[%c0_6, %c2, %c0_7, %c0_8] : memref<1x4x2x128xf32, #tpu.memory_space<vmem>>, vector<1x1x2x128xf32>
    %5 = vector.shape_cast %4 : vector<1x1x2x128xf32> to vector<2x128xf32>
    %c0_9 = arith.constant 0 : index
    %c3 = arith.constant 3 : index
    %c0_10 = arith.constant 0 : index
    %c0_11 = arith.constant 0 : index
    %6 = vector.load %arg2[%c0_9, %c3, %c0_10, %c0_11] : memref<1x4x2x128xf32, #tpu.memory_space<vmem>>, vector<1x1x2x128xf32>
    %7 = vector.shape_cast %6 : vector<1x1x2x128xf32> to vector<2x128xf32>
    %c0_12 = arith.constant 0 : index
    %c0_13 = arith.constant 0 : index
    %8 = memref.load %arg3[%c0_12, %c0_13] : memref<4x4xf32, #tpu.memory_space<smem>>
    %9 = vector.broadcast %8 : f32 to vector<2x128xf32>
    %10 = arith.mulf %9, %1 : vector<2x128xf32>
    %c0_14 = arith.constant 0 : index
    %11 = memref.load %arg4[%c0_14] : memref<4xf32, #tpu.memory_space<smem>>
    %12 = vector.broadcast %11 : f32 to vector<2x128xf32>
    %13 = arith.addf %10, %12 : vector<2x128xf32>
    %c0_15 = arith.constant 0 : index
    %c1_16 = arith.constant 1 : index
    %14 = memref.load %arg3[%c0_15, %c1_16] : memref<4x4xf32, #tpu.memory_space<smem>>
    %15 = vector.broadcast %14 : f32 to vector<2x128xf32>
    %16 = arith.mulf %15, %3 : vector<2x128xf32>
    %17 = arith.addf %13, %16 : vector<2x128xf32>
    %c0_17 = arith.constant 0 : index
    %c2_18 = arith.constant 2 : index
    %18 = memref.load %arg3[%c0_17, %c2_18] : memref<4x4xf32, #tpu.memory_space<smem>>
    %19 = vector.broadcast %18 : f32 to vector<2x128xf32>
    %20 = arith.mulf %19, %5 : vector<2x128xf32>
    %21 = arith.addf %17, %20 : vector<2x128xf32>
    %c0_19 = arith.constant 0 : index
    %c3_20 = arith.constant 3 : index
    %22 = memref.load %arg3[%c0_19, %c3_20] : memref<4x4xf32, #tpu.memory_space<smem>>
    %23 = vector.broadcast %22 : f32 to vector<2x128xf32>
    %24 = arith.mulf %23, %7 : vector<2x128xf32>
    %25 = arith.addf %21, %24 : vector<2x128xf32>
    %c0_21 = arith.constant 0 : index
    %c0_22 = arith.constant 0 : index
    %c0_23 = arith.constant 0 : index
    %c0_24 = arith.constant 0 : index
    %26 = vector.load %arg5[%c0_21, %c0_22, %c0_23, %c0_24] : memref<1x4x2x128xf32, #tpu.memory_space<vmem>>, vector<1x1x2x128xf32>
    %27 = vector.shape_cast %26 : vector<1x1x2x128xf32> to vector<2x128xf32>
    %28 = vector.shape_cast %25 : vector<2x128xf32> to vector<1x1x2x128xf32>
    tpu.vector_store %arg5[%c0_21, %c0_22, %c0_23, %c0_24], %28 {strides = array<i32>} : memref<1x4x2x128xf32, #tpu.memory_space<vmem>>, vector<1x1x2x128xf32>,
    %c1_25 = arith.constant 1 : index
    %c0_26 = arith.constant 0 : index
    %29 = memref.load %arg3[%c1_25, %c0_26] : memref<4x4xf32, #tpu.memory_space<smem>>
    %30 = vector.broadcast %29 : f32 to vector<2x128xf32>
    %31 = arith.mulf %30, %1 : vector<2x128xf32>
    %c1_27 = arith.constant 1 : index
    %32 = memref.load %arg4[%c1_27] : memref<4xf32, #tpu.memory_space<smem>>
    %33 = vector.broadcast %32 : f32 to vector<2x128xf32>
    %34 = arith.addf %31, %33 : vector<2x128xf32>
    %c1_28 = arith.constant 1 : index
    %c1_29 = arith.constant 1 : index
    %35 = memref.load %arg3[%c1_28, %c1_29] : memref<4x4xf32, #tpu.memory_space<smem>>
    %36 = vector.broadcast %35 : f32 to vector<2x128xf32>
    %37 = arith.mulf %36, %3 : vector<2x128xf32>
    %38 = arith.addf %34, %37 : vector<2x128xf32>
    %c1_30 = arith.constant 1 : index
    %c2_31 = arith.constant 2 : index
    %39 = memref.load %arg3[%c1_30, %c2_31] : memref<4x4xf32, #tpu.memory_space<smem>>
    %40 = vector.broadcast %39 : f32 to vector<2x128xf32>
    %41 = arith.mulf %40, %5 : vector<2x128xf32>
    %42 = arith.addf %38, %41 : vector<2x128xf32>
    %c1_32 = arith.constant 1 : index
    %c3_33 = arith.constant 3 : index
    %43 = memref.load %arg3[%c1_32, %c3_33] : memref<4x4xf32, #tpu.memory_space<smem>>
    %44 = vector.broadcast %43 : f32 to vector<2x128xf32>
    %45 = arith.mulf %44, %7 : vector<2x128xf32>
    %46 = arith.addf %42, %45 : vector<2x128xf32>
    %c0_34 = arith.constant 0 : index
    %c1_35 = arith.constant 1 : index
    %c0_36 = arith.constant 0 : index
    %c0_37 = arith.constant 0 : index
    %47 = vector.load %arg5[%c0_34, %c1_35, %c0_36, %c0_37] : memref<1x4x2x128xf32, #tpu.memory_space<vmem>>, vector<1x1x2x128xf32>
    %48 = vector.shape_cast %47 : vector<1x1x2x128xf32> to vector<2x128xf32>
    %49 = vector.shape_cast %46 : vector<2x128xf32> to vector<1x1x2x128xf32>
    tpu.vector_store %arg5[%c0_34, %c1_35, %c0_36, %c0_37], %49 {strides = array<i32>} : memref<1x4x2x128xf32, #tpu.memory_space<vmem>>, vector<1x1x2x128xf32>,
    %c2_38 = arith.constant 2 : index
    %c0_39 = arith.constant 0 : index
    %50 = memref.load %arg3[%c2_38, %c0_39] : memref<4x4xf32, #tpu.memory_space<smem>>
    %51 = vector.broadcast %50 : f32 to vector<2x128xf32>
    %52 = arith.mulf %51, %1 : vector<2x128xf32>
    %c2_40 = arith.constant 2 : index
    %53 = memref.load %arg4[%c2_40] : memref<4xf32, #tpu.memory_space<smem>>
    %54 = vector.broadcast %53 : f32 to vector<2x128xf32>
    %55 = arith.addf %52, %54 : vector<2x128xf32>
    %c2_41 = arith.constant 2 : index
    %c1_42 = arith.constant 1 : index
    %56 = memref.load %arg3[%c2_41, %c1_42] : memref<4x4xf32, #tpu.memory_space<smem>>
    %57 = vector.broadcast %56 : f32 to vector<2x128xf32>
    %58 = arith.mulf %57, %3 : vector<2x128xf32>
    %59 = arith.addf %55, %58 : vector<2x128xf32>
    %c2_43 = arith.constant 2 : index
    %c2_44 = arith.constant 2 : index
    %60 = memref.load %arg3[%c2_43, %c2_44] : memref<4x4xf32, #tpu.memory_space<smem>>
    %61 = vector.broadcast %60 : f32 to vector<2x128xf32>
    %62 = arith.mulf %61, %5 : vector<2x128xf32>
    %63 = arith.addf %59, %62 : vector<2x128xf32>
    %c2_45 = arith.constant 2 : index
    %c3_46 = arith.constant 3 : index
    %64 = memref.load %arg3[%c2_45, %c3_46] : memref<4x4xf32, #tpu.memory_space<smem>>
    %65 = vector.broadcast %64 : f32 to vector<2x128xf32>
    %66 = arith.mulf %65, %7 : vector<2x128xf32>
    %67 = arith.addf %63, %66 : vector<2x128xf32>
    %c0_47 = arith.constant 0 : index
    %c2_48 = arith.constant 2 : index
    %c0_49 = arith.constant 0 : index
    %c0_50 = arith.constant 0 : index
    %68 = vector.load %arg5[%c0_47, %c2_48, %c0_49, %c0_50] : memref<1x4x2x128xf32, #tpu.memory_space<vmem>>, vector<1x1x2x128xf32>
    %69 = vector.shape_cast %68 : vector<1x1x2x128xf32> to vector<2x128xf32>
    %70 = vector.shape_cast %67 : vector<2x128xf32> to vector<1x1x2x128xf32>
    tpu.vector_store %arg5[%c0_47, %c2_48, %c0_49, %c0_50], %70 {strides = array<i32>} : memref<1x4x2x128xf32, #tpu.memory_space<vmem>>, vector<1x1x2x128xf32>,
    %c3_51 = arith.constant 3 : index
    %c0_52 = arith.constant 0 : index
    %71 = memref.load %arg3[%c3_51, %c0_52] : memref<4x4xf32, #tpu.memory_space<smem>>
    %72 = vector.broadcast %71 : f32 to vector<2x128xf32>
    %73 = arith.mulf %72, %1 : vector<2x128xf32>
    %c3_53 = arith.constant 3 : index
    %74 = memref.load %arg4[%c3_53] : memref<4xf32, #tpu.memory_space<smem>>
    %75 = vector.broadcast %74 : f32 to vector<2x128xf32>
    %76 = arith.addf %73, %75 : vector<2x128xf32>
    %c3_54 = arith.constant 3 : index
    %c1_55 = arith.constant 1 : index
    %77 = memref.load %arg3[%c3_54, %c1_55] : memref<4x4xf32, #tpu.memory_space<smem>>
    %78 = vector.broadcast %77 : f32 to vector<2x128xf32>
    %79 = arith.mulf %78, %3 : vector<2x128xf32>
    %80 = arith.addf %76, %79 : vector<2x128xf32>
    %c3_56 = arith.constant 3 : index
    %c2_57 = arith.constant 2 : index
    %81 = memref.load %arg3[%c3_56, %c2_57] : memref<4x4xf32, #tpu.memory_space<smem>>
    %82 = vector.broadcast %81 : f32 to vector<2x128xf32>
    %83 = arith.mulf %82, %5 : vector<2x128xf32>
    %84 = arith.addf %80, %83 : vector<2x128xf32>
    %c3_58 = arith.constant 3 : index
    %c3_59 = arith.constant 3 : index
    %85 = memref.load %arg3[%c3_58, %c3_59] : memref<4x4xf32, #tpu.memory_space<smem>>
    %86 = vector.broadcast %85 : f32 to vector<2x128xf32>
    %87 = arith.mulf %86, %7 : vector<2x128xf32>
    %88 = arith.addf %84, %87 : vector<2x128xf32>
    %c0_60 = arith.constant 0 : index
    %c3_61 = arith.constant 3 : index
    %c0_62 = arith.constant 0 : index
    %c0_63 = arith.constant 0 : index
    %89 = vector.load %arg5[%c0_60, %c3_61, %c0_62, %c0_63] : memref<1x4x2x128xf32, #tpu.memory_space<vmem>>, vector<1x1x2x128xf32>
    %90 = vector.shape_cast %89 : vector<1x1x2x128xf32> to vector<2x128xf32>
    %91 = vector.shape_cast %88 : vector<2x128xf32> to vector<1x1x2x128xf32>
    tpu.vector_store %arg5[%c0_60, %c3_61, %c0_62, %c0_63], %91 {strides = array<i32>} : memref<1x4x2x128xf32, #tpu.memory_space<vmem>>, vector<1x1x2x128xf32>,
    return
  }
  func.func @transform_0(%arg0: i32, %arg1: i32) -> (i32, i32, i32, i32) {
    %c0_i32 = arith.constant 0 : i32
    %c0_i32_0 = arith.constant 0 : i32
    %c0_i32_1 = arith.constant 0 : i32
    return %arg0, %c0_i32, %arg1, %c0_i32_0 : i32, i32, i32, i32
  }
  func.func @transform_1(%arg0: i32, %arg1: i32) -> (i32, i32) {
    %c0_i32 = arith.constant 0 : i32
    %c0_i32_0 = arith.constant 0 : i32
    %c0_i32_1 = arith.constant 0 : i32
    return %c0_i32, %c0_i32_0 : i32, i32
  }
  func.func @transform_2(%arg0: i32, %arg1: i32) -> i32 {
    %c0_i32 = arith.constant 0 : i32
    %c0_i32_0 = arith.constant 0 : i32
    return %c0_i32 : i32
  }
  func.func @transform_3(%arg0: i32, %arg1: i32) -> (i32, i32, i32, i32) {
    %c0_i32 = arith.constant 0 : i32
    %c0_i32_0 = arith.constant 0 : i32
    %c0_i32_1 = arith.constant 0 : i32
    return %arg0, %c0_i32, %arg1, %c0_i32_0 : i32, i32, i32, i32
  }
}

</mosaic_0001>

<llo_original>
// kernel: conv_block_forward.1
$region0: #{conv_block_forward.1}
  #allocation0 [shape = 'u32[]', space=smem, size = 0x4, offset = 0x4, fixed_abs, tag = 'smem constant byte address 0x4 - core index']
  #allocation1 [shape = 'u32[144,128]{1,0:T(1,128)}', space=vmem, size = 0x12000, scoped, tag = 'internal scratch']
  %s0 = inlined_call_operand.vmem [shape: f32[2,4,2,128], index: 0, kind: input, shape index: {}]
  %s1 = inlined_call_operand.vmem [shape: f32[4,4], index: 1, kind: input, shape index: {}]
  %s2 = inlined_call_operand.vmem [shape: f32[4], index: 2, kind: input, shape index: {}]
  %s3 = inlined_call_operand.vmem [shape: f32[2,4,2,128], index: 3, kind: output, shape index: {}]
  %s4 = sld [smem:[#allocation0]]
  $region53: #{conv_block_forward.1} parent=0
    _
  %s6 = ssub.s32 1, %s4
  %s7 = scalar_select 0, %s6, %s4
  $region1: #{conv_block_forward.1} parent=0
    #allocation2 [shape = 'u8[2048]{0}', space=smem, size = 0x800, scoped, tag = 'input window, operand 1, single buffered']
    #allocation3 [shape = 's32[2]{0}', space=sflag, size = 0x8, scoped, tag = 'scoped memory for conv_block_forward.1']
    #allocation4 [shape = 'u8[512]{0}', space=smem, size = 0x200, scoped, tag = 'input window, operand 2, single buffered']
    #allocation5 [shape = 's32[1]{0}', space=sflag, size = 0x4, scoped, tag = 'scoped memory for conv_block_forward.1']
    %8 = vsyncpa [#allocation3], 0
    %9 = vsyncpa [#allocation5], 0
    loop: start=0, step=1, limit=4
    $region2: #{conv_block_forward.1} parent=1 // loop_pre_header
      _
    $region3: #{conv_block_forward.1} parent=1 // loop_header
      %s11 = sphi 0, %s15
      %p12 = scmp.ge.s32.totalorder %s11, 4
      %s18 = sphi 0, %s30
      %s19 = sphi 0, %s26
      %s20 = sphi 0, %s18
      %s21 = sphi 0, %s19
      %s22 = sphi 0, %s20
      %s23 = sphi 0, %s21
      %s35 = sphi 0, %s37
      %s38 = sphi 0, %s35
      %s39 = sphi 0, %s38
      %s55 = sphi 0, %s39
      %s59 = sphi 0, %s59
      %s61 = sphi 0, %s59
      %s62 = sphi 0, %s61
      %s76 = sphi 0, %s62
      %s80 = sphi 0, %s80
      %s82 = sphi 0, %s80
      %s83 = sphi 0, %s82
      %s97 = sphi 0, %s83
      %s105 = sphi 0, %s107
      %s108 = sphi 0, %s105
      %s109 = sphi 0, %s108
      %s125 = sphi 0, %s109
    $region4: #{conv_block_forward.1} parent=1 // loop_header_branch
      %14 = sbr.rel (%p12) target = $region8
    $region5: #{conv_block_forward.1} parent=1 // loop_body
      %s16 = ssub.s32 %s11, 1
      %s17 = ssub.s32 %s11, 2
      %s24 = sadd.s32 1, %s19
      %p25 = scmp.ge.s32.totalorder %s24, 1
      %s26 = scalar_select %p25, 0, %s24
      %s27 = sadd.s32 1, %s18
      %s28 = scalar_select %p25, %s27, %s18
      %p29 = scmp.ge.s32.totalorder %s28, 2
      %s30 = scalar_select %p29, 0, %s28
      %s31 = ssub.s32 %s18, %s30
      %s32 = ssub.s32 %s19, %s26
      %s33 = sor.u32 %s31, %s32
      %p34 = scmp.eq.s32.totalorder %s33, 0
      %s36 = sadd.s32 %s35, 1
      %s37 = scalar_select %p34, %s35, %s36
      %p40 = pneg %p34
      %p41 = scmp.eq.s32.totalorder %s11, 1
      %p42 = por %p40, %p41
      %p43 = scmp.ne.s32.totalorder %s35, %s38
      %p44 = scmp.eq.s32.totalorder %s11, 0
      %p45 = por %p43, %p44
      %p46 = scmp.ne.s32.totalorder %s35, %s38
      %p47 = scmp.eq.s32.totalorder %s16, 1
      %p48 = por %p46, %p47
      %p49 = scmp.ne.s32.totalorder %s38, %s39
      %p50 = scmp.eq.s32.totalorder %s16, 0
      %p51 = por %p49, %p50
      %p52 = scmp.ne.s32.totalorder %s38, %s39
      %p53 = scmp.eq.s32.totalorder %s17, 1
      %p54 = por %p52, %p53
      %p56 = scmp.ne.s32.totalorder %s39, %s55
      %p57 = scmp.eq.s32.totalorder %s17, 0
      %p58 = por %p56, %p57
      %s60 = sadd.s32 %s59, 1
      %p63 = scmp.eq.s32.totalorder %s11, 1
      %p64 = scmp.ne.s32.totalorder %s59, %s61
      %p65 = scmp.eq.s32.totalorder %s11, 0
      %p66 = por %p64, %p65
      %p67 = scmp.ne.s32.totalorder %s59, %s61
      %p68 = scmp.eq.s32.totalorder %s16, 1
      %p69 = por %p67, %p68
      %p70 = scmp.ne.s32.totalorder %s61, %s62
      %p71 = scmp.eq.s32.totalorder %s16, 0
      %p72 = por %p70, %p71
      %p73 = scmp.ne.s32.totalorder %s61, %s62
      %p74 = scmp.eq.s32.totalorder %s17, 1
      %p75 = por %p73, %p74
      %p77 = scmp.ne.s32.totalorder %s62, %s76
      %p78 = scmp.eq.s32.totalorder %s17, 0
      %p79 = por %p77, %p78
      %s81 = sadd.s32 %s80, 1
      %p84 = scmp.eq.s32.totalorder %s11, 1
      %p85 = scmp.ne.s32.totalorder %s80, %s82
      %p86 = scmp.eq.s32.totalorder %s11, 0
      %p87 = por %p85, %p86
      %p88 = scmp.ne.s32.totalorder %s80, %s82
      %p89 = scmp.eq.s32.totalorder %s16, 1
      %p90 = por %p88, %p89
      %p91 = scmp.ne.s32.totalorder %s82, %s83
      %p92 = scmp.eq.s32.totalorder %s16, 0
      %p93 = por %p91, %p92
      %p94 = scmp.ne.s32.totalorder %s82, %s83
      %p95 = scmp.eq.s32.totalorder %s17, 1
      %p96 = por %p94, %p95
      %p98 = scmp.ne.s32.totalorder %s83, %s97
      %p99 = scmp.eq.s32.totalorder %s17, 0
      %p100 = por %p98, %p99
      %s101 = ssub.s32 %s18, %s30
      %s102 = ssub.s32 %s19, %s26
      %s103 = sor.u32 %s101, %s102
      %p104 = scmp.eq.s32.totalorder %s103, 0
      %s106 = sadd.s32 %s105, 1
      %s107 = scalar_select %p104, %s105, %s106
      %p110 = pneg %p104
      %p111 = scmp.eq.s32.totalorder %s11, 1
      %p112 = por %p110, %p111
      %p113 = scmp.ne.s32.totalorder %s105, %s108
      %p114 = scmp.eq.s32.totalorder %s11, 0
      %p115 = por %p113, %p114
      %p116 = scmp.ne.s32.totalorder %s105, %s108
      %p117 = scmp.eq.s32.totalorder %s16, 1
      %p118 = por %p116, %p117
      %p119 = scmp.ne.s32.totalorder %s108, %s109
      %p120 = scmp.eq.s32.totalorder %s16, 0
      %p121 = por %p119, %p120
      %p122 = scmp.ne.s32.totalorder %s108, %s109
      %p123 = scmp.eq.s32.totalorder %s17, 1
      %p124 = por %p122, %p123
      %p126 = scmp.ne.s32.totalorder %s109, %s125
      %p127 = scmp.eq.s32.totalorder %s17, 0
      %p128 = por %p126, %p127
      %p129 = scmp.le.s32.totalorder 1, %s11
      %p130 = scmp.lt.s32.totalorder %s11, 3
      %p131 = pnand %p129, %p130
      %p132 = pneg %p131
      // Predicated region
      $region9: #{conv_block_forward.1} parent=5 // pred_check
        _
      $region10: #{conv_block_forward.1} parent=5 // pred_check_branch
        %134 = sbr.rel (%p131) target = $region12
      $region11: #{conv_block_forward.1} parent=5 // pred_region
        %s135 = ssub.s32 %s11, 1
        // Predicated region
        $region13: #{conv_block_forward.1} parent=11 // pred_check
          %p136 = pneg %p72
        $region14: #{conv_block_forward.1} parent=11 // pred_check_branch
          %138 = sbr.rel (%p136) target = $region16
        $region15: #{conv_block_forward.1} parent=11 // pred_region
          %s140 = ssub.s32 64, 64
          %141 = vsyncadd [#allocation3], %s140
          %s143 = sshll.u32 %s1, 4
          %s144 = int_to_ptr.vmem [resolvable:$true] %s143
          %146 = dma.vmem_to_smem %s144, 64, [#allocation2], [#allocation3]
        $region16: #{conv_block_forward.1} parent=11 // pred_fallthru
          _
        // Predicated region
        $region17: #{conv_block_forward.1} parent=11 // pred_check
          %p147 = pneg %p93
        $region18: #{conv_block_forward.1} parent=11 // pred_check_branch
          %149 = sbr.rel (%p147) target = $region20
        $region19: #{conv_block_forward.1} parent=11 // pred_region
          %s151 = ssub.s32 16, 16
          %152 = vsyncadd [#allocation5], %s151
          %s154 = sshll.u32 %s2, 4
          %s155 = int_to_ptr.vmem [resolvable:$true] %s154
          %157 = dma.vmem_to_smem %s155, 16, [#allocation4], [#allocation5]
        $region20: #{conv_block_forward.1} parent=11 // pred_fallthru
          _
      $region12: #{conv_block_forward.1} parent=5 // pred_fallthru
        _
      %p158 = scmp.lt.s32.totalorder %s11, 2
      // Predicated region
      $region21: #{conv_block_forward.1} parent=5 // pred_check
        %p159 = pneg %p158
      $region22: #{conv_block_forward.1} parent=5 // pred_check_branch
        %161 = sbr.rel (%p159) target = $region24
      $region23: #{conv_block_forward.1} parent=5 // pred_region
        // Predicated region
        $region25: #{conv_block_forward.1} parent=23 // pred_check
          %p162 = pneg %p45
        $region26: #{conv_block_forward.1} parent=23 // pred_check_branch
          %164 = sbr.rel (%p162) target = $region28
        $region27: #{conv_block_forward.1} parent=23 // pred_region
          %p165 = scmp.lt.s32.totalorder %s18, 1
          %s166 = scalar_select %p165, %s18, 1
          %p167 = scmp.lt.s32.totalorder %s19, 0
          %s168 = scalar_select %p167, %s19, 0
          %s169 = smul.addr %s166, 4
          %s170 = sadd.s32 %s168, %s169
          %s171 = smul.addr %s170, 2
          %s172 = scalar_lea.vmem %s0, %s171
        $region28: #{conv_block_forward.1} parent=23 // pred_fallthru
          _
      $region24: #{conv_block_forward.1} parent=5 // pred_fallthru
        _
      %p173 = scmp.le.s32.totalorder 1, %s11
      %p174 = scmp.lt.s32.totalorder %s11, 3
      %p175 = pnand %p173, %p174
      %p176 = pneg %p175
      // Predicated region
      $region29: #{conv_block_forward.1} parent=5 // pred_check
        _
      $region30: #{conv_block_forward.1} parent=5 // pred_check_branch
        %178 = sbr.rel (%p175) target = $region32
      $region31: #{conv_block_forward.1} parent=5 // pred_region
        %s179 = ssub.s32 %s11, 1
        // Predicated region
        $region33: #{conv_block_forward.1} parent=31 // pred_check
          %p180 = pneg %p72
        $region34: #{conv_block_forward.1} parent=31 // pred_check_branch
          %182 = sbr.rel (%p180) target = $region36
        $region35: #{conv_block_forward.1} parent=31 // pred_region
          %183 = dma.done [#allocation3], 64
        $region36: #{conv_block_forward.1} parent=31 // pred_fallthru
          _
        // Predicated region
        $region37: #{conv_block_forward.1} parent=31 // pred_check
          %p184 = pneg %p93
        $region38: #{conv_block_forward.1} parent=31 // pred_check_branch
          %186 = sbr.rel (%p184) target = $region40
        $region39: #{conv_block_forward.1} parent=31 // pred_region
          %187 = dma.done [#allocation5], 16
        $region40: #{conv_block_forward.1} parent=31 // pred_fallthru
          _
        %188 = sfence
        %p189 = scmp.lt.s32.totalorder %s20, 1
        %s190 = scalar_select %p189, %s20, 1
        %p191 = scmp.lt.s32.totalorder %s21, 0
        %s192 = scalar_select %p191, %s21, 0
        %s193 = smul.addr %s190, 4
        %s194 = sadd.s32 %s192, %s193
        %s195 = smul.addr %s194, 2
        %s196 = scalar_lea.vmem %s0, %s195
        %p197 = pneg %p51
        %p198 = pneg %p48
        %p199 = pneg %p72
        %p200 = pneg %p69
        %p201 = pneg %p93
        %p202 = pneg %p90
        %p203 = pneg %p121
        %p204 = pneg %p118
        %p205 = scmp.lt.s32.totalorder %s20, 1
        %s206 = scalar_select %p205, %s20, 1
        %p207 = scmp.lt.s32.totalorder %s21, 0
        %s208 = scalar_select %p207, %s21, 0
        %s209 = smul.addr %s206, 4
        %s210 = sadd.s32 %s208, %s209
        %s211 = smul.addr %s210, 2
        %s212 = scalar_lea.vmem %s3, %s211
        %p213 = scmp.lt.s32.totalorder %s20, 1
        %s214 = scalar_select %p213, %s20, 1
        %p215 = scmp.lt.s32.totalorder %s21, 0
        %s216 = scalar_select %p215, %s21, 0
        %s217 = smul.addr %s214, 4
        %s218 = sadd.s32 %s216, %s217
        %s219 = smul.addr %s218, 2
        %s220 = scalar_lea.vmem %s0, %s219
        %p221 = scmp.lt.s32.totalorder %s20, 1
        %s222 = scalar_select %p221, %s20, 1
        %p223 = scmp.lt.s32.totalorder %s21, 0
        %s224 = scalar_select %p223, %s21, 0
        %s225 = smul.addr %s222, 4
        %s226 = sadd.s32 %s224, %s225
        %s227 = smul.addr %s226, 2
        %s228 = scalar_lea.vmem %s3, %s227
        %v229 = vld [vmem:[%s220] sm:$0x3]
        %s230 = scalar_lea.vmem %s220, 2
        %v231 = vld [vmem:[%s230] sm:$0x3]
        %s232 = scalar_lea.vmem %s220, 4
        %v233 = vld [vmem:[%s232] sm:$0x3]
        %s234 = scalar_lea.vmem %s220, 6
        %v235 = vld [vmem:[%s234] sm:$0x3]
        %s236 = sld [smem:[#allocation2]]
        %v237 = vstv %s236
        %v238 = vmul.f32 %v237, %v229
        %s239 = sld [smem:[#allocation4]]
        %v240 = vstv %s239
        %v241 = vadd.f32 %v238, %v240
        %s242 = sld [smem:[#allocation2 + $0x1]]
        %v243 = vstv %s242
        %v244 = vmul.f32 %v243, %v231
        %v245 = vadd.f32 %v241, %v244
        %s246 = sld [smem:[#allocation2 + $0x2]]
        %v247 = vstv %s246
        %v248 = vmul.f32 %v247, %v233
        %v249 = vadd.f32 %v245, %v248
        %s250 = sld [smem:[#allocation2 + $0x3]]
        %v251 = vstv %s250
        %v252 = vmul.f32 %v251, %v235
        %v253 = vadd.f32 %v249, %v252
        %254 = vst [vmem:[%s228] sm:$0x3] %v253
        %s255 = sld [smem:[#allocation2 + $0x80]]
        %v256 = vstv %s255
        %v257 = vmul.f32 %v256, %v229
        %s258 = sld [smem:[#allocation4 + $0x1]]
        %v259 = vstv %s258
        %v260 = vadd.f32 %v257, %v259
        %s261 = sld [smem:[#allocation2 + $0x81]]
        %v262 = vstv %s261
        %v263 = vmul.f32 %v262, %v231
        %v264 = vadd.f32 %v260, %v263
        %s265 = sld [smem:[#allocation2 + $0x82]]
        %v266 = vstv %s265
        %v267 = vmul.f32 %v266, %v233
        %v268 = vadd.f32 %v264, %v267
        %s269 = sld [smem:[#allocation2 + $0x83]]
        %v270 = vstv %s269
        %v271 = vmul.f32 %v270, %v235
        %v272 = vadd.f32 %v268, %v271
        %s273 = scalar_lea.vmem %s228, 2
        %274 = vst [vmem:[%s273] sm:$0x3] %v272
        %s275 = sld [smem:[#allocation2 + $0x100]]
        %v276 = vstv %s275
        %v277 = vmul.f32 %v276, %v229
        %s278 = sld [smem:[#allocation4 + $0x2]]
        %v279 = vstv %s278
        %v280 = vadd.f32 %v277, %v279
        %s281 = sld [smem:[#allocation2 + $0x101]]
        %v282 = vstv %s281
        %v283 = vmul.f32 %v282, %v231
        %v284 = vadd.f32 %v280, %v283
        %s285 = sld [smem:[#allocation2 + $0x102]]
        %v286 = vstv %s285
        %v287 = vmul.f32 %v286, %v233
        %v288 = vadd.f32 %v284, %v287
        %s289 = sld [smem:[#allocation2 + $0x103]]
        %v290 = vstv %s289
        %v291 = vmul.f32 %v290, %v235
        %v292 = vadd.f32 %v288, %v291
        %s293 = scalar_lea.vmem %s228, 4
        %294 = vst [vmem:[%s293] sm:$0x3] %v292
        %s295 = sld [smem:[#allocation2 + $0x180]]
        %v296 = vstv %s295
        %v297 = vmul.f32 %v296, %v229
        %s298 = sld [smem:[#allocation4 + $0x3]]
        %v299 = vstv %s298
        %v300 = vadd.f32 %v297, %v299
        %s301 = sld [smem:[#allocation2 + $0x181]]
        %v302 = vstv %s301
        %v303 = vmul.f32 %v302, %v231
        %v304 = vadd.f32 %v300, %v303
        %s305 = sld [smem:[#allocation2 + $0x182]]
        %v306 = vstv %s305
        %v307 = vmul.f32 %v306, %v233
        %v308 = vadd.f32 %v304, %v307
        %s309 = sld [smem:[#allocation2 + $0x183]]
        %v310 = vstv %s309
        %v311 = vmul.f32 %v310, %v235
        %v312 = vadd.f32 %v308, %v311
        %s313 = scalar_lea.vmem %s228, 6
        %314 = vst [vmem:[%s313] sm:$0x3] %v312
        %p315 = scmp.lt.s32.totalorder %s20, 1
        %s316 = scalar_select %p315, %s20, 1
        %p317 = scmp.lt.s32.totalorder %s21, 0
        %s318 = scalar_select %p317, %s21, 0
        %s319 = smul.addr %s316, 4
        %s320 = sadd.s32 %s318, %s319
        %s321 = smul.addr %s320, 2
        %s322 = scalar_lea.vmem %s3, %s321
        // Predicated region
        $region41: #{conv_block_forward.1} parent=31 // pred_check
          %p323 = pneg %p118
        $region42: #{conv_block_forward.1} parent=31 // pred_check_branch
          %325 = sbr.rel (%p323) target = $region44
        $region43: #{conv_block_forward.1} parent=31 // pred_region
          _
        $region44: #{conv_block_forward.1} parent=31 // pred_fallthru
          _
      $region32: #{conv_block_forward.1} parent=5 // pred_fallthru
        _
      %p326 = scmp.le.s32.totalorder 2, %s11
      // Predicated region
      $region45: #{conv_block_forward.1} parent=5 // pred_check
        %p327 = pneg %p326
      $region46: #{conv_block_forward.1} parent=5 // pred_check_branch
        %329 = sbr.rel (%p327) target = $region48
      $region47: #{conv_block_forward.1} parent=5 // pred_region
        %s330 = ssub.s32 %s11, 2
        // Predicated region
        $region49: #{conv_block_forward.1} parent=47 // pred_check
          %p331 = pneg %p124
        $region50: #{conv_block_forward.1} parent=47 // pred_check_branch
          %333 = sbr.rel (%p331) target = $region52
        $region51: #{conv_block_forward.1} parent=47 // pred_region
          %p334 = scmp.lt.s32.totalorder %s22, 1
          %s335 = scalar_select %p334, %s22, 1
          %p336 = scmp.lt.s32.totalorder %s23, 0
          %s337 = scalar_select %p336, %s23, 0
          %s338 = smul.addr %s335, 4
          %s339 = sadd.s32 %s337, %s338
          %s340 = smul.addr %s339, 2
          %s341 = scalar_lea.vmem %s3, %s340
        $region52: #{conv_block_forward.1} parent=47 // pred_fallthru
          _
      $region48: #{conv_block_forward.1} parent=5 // pred_fallthru
        _
    $region6: #{conv_block_forward.1} parent=1 // loop_footer
      %s15 = sadd.s32 1, %s11
    $region7: #{conv_block_forward.1} parent=1 // loop_footer_branch
      %10 = sbr.rel target = $region3
    $region8: #{conv_block_forward.1} parent=1 // loop_exit
      _
    %342 = vsyncpa [#allocation3], 1
    %s343 = scalar_lea.sflag [#allocation3], 1
    %344 = vsyncpa %s343, 1
    %345 = vsyncpa [#allocation5], 1

</llo_original>
